<compile_context>
chip_gen: v7x
topology: tpu7x:2x2x1
jax: 0.10.0
libtpu: 0.0.40
codegen_flags: <defaults>
</compile_context>

<pallas_src>
import jax
import jax.numpy as jnp
from jax.experimental import pallas as pl
from jax.experimental.pallas import tpu as pltpu

LANE = 128  # TPU lane width


def _round_up(x, m):
    return ((x + m - 1) // m) * m


def _make_kernel(layout, n_layers):
    """layout: tuple of (row_start, padded_in_rows) per layer, static Python ints."""

    def kernel(x_ref, w_ref, b_ref, o_ref):
        # Matmul operands bf16 (MXU-native); accumulate / bias / ReLU in f32 (VPU).
        h = x_ref[...].astype(jnp.bfloat16)
        for i, (row_start, pad_in) in enumerate(layout):
            w = w_ref[pl.ds(row_start, pad_in), :]           # bf16 (pad_in, 128)
            b = b_ref[pl.ds(8 * i, 1), :]                    # f32  (1, 128)
            acc = jnp.dot(h, w, preferred_element_type=jnp.float32) + b
            if i < n_layers - 1:
                h = jnp.maximum(acc, 0.0).astype(jnp.bfloat16)
            else:
                o_ref[...] = acc                             # lane-dense (bt, 128) store

    return kernel


def pack_params(params):
    """Pack [(W(in,out) f32, b(out,) f32), ...] into:
         wbuf : bf16 (sum padded_in, 128)  -- weights, zero-padded, row-stacked
         bbuf : f32  (8*n_layers, 128)     -- bias i lives in row 8*i
       Row starts are multiples of 16 so every chunk is bf16-tile aligned."""
    n = len(params)
    pad_ins, pad_outs = [], []
    for i, (w, _) in enumerate(params):
        in_dim, out_dim = w.shape
        pad_in = _round_up(in_dim, 16) if i == 0 else pad_outs[i - 1]
        pad_out = _round_up(out_dim, LANE)
        pad_ins.append(pad_in)
        pad_outs.append(pad_out)
    width = max(pad_outs)

    total_rows = sum(pad_ins)
    wbuf = jnp.zeros((total_rows, width), jnp.float32)
    bbuf = jnp.zeros((8 * n, width), jnp.float32)
    layout = []
    row = 0
    for i, (w, b) in enumerate(params):
        in_dim, out_dim = w.shape
        wbuf = wbuf.at[row:row + in_dim, :out_dim].set(w)
        bbuf = bbuf.at[8 * i, :out_dim].set(b.reshape(-1))
        layout.append((row, pad_ins[i]))
        row += pad_ins[i]

    wbuf = wbuf.astype(jnp.bfloat16)
    return wbuf, bbuf, tuple(layout), width


def mlp_forward(x, packed, action_size, batch_tile=256):
    """x: (B, state_size) f32. packed: output of pack_params."""
    wbuf, bbuf, layout, width = packed
    B, in_dim = x.shape
    pad_in0 = layout[0][1]
    n_layers = len(layout)

    # Pad input feature dim to the (tile-aligned) first-layer row count.
    if in_dim < pad_in0:
        x = jnp.pad(x, ((0, 0), (0, pad_in0 - in_dim)))

    # One "parallel" batch grid axis (megacore lever on v7x). Tiny batches -> grid=(1,).
    bt = batch_tile if B >= batch_tile else _round_up(B, 8)
    B_pad = _round_up(B, bt)
    if B_pad != B:
        x = jnp.pad(x, ((0, B_pad - B), (0, 0)))

    kernel = _make_kernel(layout, n_layers)

    out = pl.pallas_call(
        kernel,
        out_shape=jax.ShapeDtypeStruct((B_pad, width), jnp.float32),
        grid=(B_pad // bt,),
        in_specs=[
            pl.BlockSpec((bt, pad_in0), lambda i: (i, 0)),
            pl.BlockSpec(wbuf.shape, lambda i: (0, 0)),   # weights VMEM-resident
            pl.BlockSpec(bbuf.shape, lambda i: (0, 0)),   # biases VMEM-resident
        ],
        out_specs=pl.BlockSpec((bt, width), lambda i: (i, 0)),
        compiler_params=pltpu.CompilerParams(
            dimension_semantics=("parallel",)),
    )(x, wbuf, bbuf)

    return out[:B, :action_size]


def init_params(key, state_size, action_size):
    """Deterministic init mirroring the nn.Linear shapes of the PyTorch module.
    Weights stored transposed, (in, out), so layers are x @ W + b."""
    dims = [state_size, 128, 64, 32, 8, action_size]
    params = []
    for i in range(len(dims) - 1):
        key, kw, kb = jax.random.split(key, 3)
        bound = 1.0 / (dims[i] ** 0.5)  # PyTorch default Linear init range
        w = jax.random.uniform(kw, (dims[i], dims[i + 1]),
                               minval=-bound, maxval=bound, dtype=jnp.float32)
        b = jax.random.uniform(kb, (dims[i + 1],),
                               minval=-bound, maxval=bound, dtype=jnp.float32)
        params.append((w, b))
    return params


def reference_forward(x, params):
    """Pure-JAX reference mirroring the kernel's bf16 matmul operands / f32 accum."""
    def q(a):
        return a.astype(jnp.bfloat16).astype(jnp.float32)

    h = x
    n = len(params)
    for i, (w, b) in enumerate(params):
        h = jnp.dot(q(h), q(w), preferred_element_type=jnp.float32) + b
        if i < n - 1:
            h = jnp.maximum(h, 0.0)
    return h


if __name__ == "__main__":
    state_size = 16
    action_size = 4
    batch = 8

    key = jax.random.PRNGKey(0)
    key, kx = jax.random.split(key)
    x = jax.random.normal(kx, (batch, state_size), dtype=jnp.float32)

    params = init_params(key, state_size, action_size)
    packed = pack_params(params)

    out = mlp_forward(x, packed, action_size)
    out = jax.block_until_ready(out)

    ref = reference_forward(x, params)
    assert out.shape == (batch, action_size)
    assert jnp.allclose(out, ref, atol=1e-2, rtol=1e-2), float(jnp.max(jnp.abs(out - ref)))

    print("KERNEL_OK")
</pallas_src>

<mosaic_0001>
module attributes {stable_mosaic.version = 11 : i64} {
  func.func @kernel(%arg0: i32, %arg1: memref<8x16xf32, #tpu.memory_space<vmem>>, %arg2: memref<528x128xbf16, #tpu.memory_space<vmem>>, %arg3: memref<40x128xf32, #tpu.memory_space<vmem>>, %arg4: memref<8x128xf32, #tpu.memory_space<vmem>>) attributes {dimension_semantics = [#tpu.dimension_semantics<parallel>], iteration_bounds = array<i64: 1>, scalar_prefetch = 0 : i64, scratch_operands = 0 : i64, tpu.core_type = #tpu.core_type<tc>, window_params = [{transform_indices = @transform_0, window_bounds = array<i64: 8, 16>}, {pipeline_mode = #tpu.pipeline_mode<synchronous>, transform_indices = @transform_1, window_bounds = array<i64: 528, 128>}, {pipeline_mode = #tpu.pipeline_mode<synchronous>, transform_indices = @transform_2, window_bounds = array<i64: 40, 128>}, {transform_indices = @transform_3, window_bounds = array<i64: 8, 128>}]} {
    %c0 = arith.constant 0 : index
    %c0_0 = arith.constant 0 : index
    %0 = vector.load %arg1[%c0, %c0_0] : memref<8x16xf32, #tpu.memory_space<vmem>>, vector<8x16xf32>
    %1 = arith.truncf %0 : vector<8x16xf32> to vector<8x16xbf16>
    %c0_1 = arith.constant 0 : index
    %c0_2 = arith.constant 0 : index
    %2 = vector.load %arg2[%c0_1, %c0_2] : memref<528x128xbf16, #tpu.memory_space<vmem>>, vector<16x128xbf16>
    %c0_3 = arith.constant 0 : index
    %c0_4 = arith.constant 0 : index
    %3 = vector.load %arg3[%c0_3, %c0_4] : memref<40x128xf32, #tpu.memory_space<vmem>>, vector<1x128xf32>
    %cst = arith.constant dense<0.000000e+00> : vector<8x128xf32>
    %4 = tpu.matmul %1, %2, %cst {dimension_numbers = #tpu.dot_dimension_numbers<[1], [0], [0], [1], [0, 0, 1, 1], [], []>} : vector<8x16xbf16>, vector<16x128xbf16>, vector<8x128xf32> -> vector<8x128xf32>
    %5 = vector.broadcast %3 : vector<1x128xf32> to vector<8x128xf32>
    %6 = arith.addf %4, %5 : vector<8x128xf32>
    %cst_5 = arith.constant 0.000000e+00 : f32
    %7 = vector.broadcast %cst_5 : f32 to vector<8x128xf32>
    %8 = arith.maximumf %6, %7 : vector<8x128xf32>
    %9 = arith.truncf %8 : vector<8x128xf32> to vector<8x128xbf16>
    %c16 = arith.constant 16 : index
    %c0_6 = arith.constant 0 : index
    %10 = vector.load %arg2[%c16, %c0_6] : memref<528x128xbf16, #tpu.memory_space<vmem>>, vector<128x128xbf16>
    %c8 = arith.constant 8 : index
    %c0_7 = arith.constant 0 : index
    %11 = vector.load %arg3[%c8, %c0_7] : memref<40x128xf32, #tpu.memory_space<vmem>>, vector<1x128xf32>
    %cst_8 = arith.constant dense<0.000000e+00> : vector<8x128xf32>
    %12 = tpu.matmul %9, %10, %cst_8 {dimension_numbers = #tpu.dot_dimension_numbers<[1], [0], [0], [1], [0, 0, 1, 1], [], []>} : vector<8x128xbf16>, vector<128x128xbf16>, vector<8x128xf32> -> vector<8x128xf32>
    %13 = vector.broadcast %11 : vector<1x128xf32> to vector<8x128xf32>
    %14 = arith.addf %12, %13 : vector<8x128xf32>
    %cst_9 = arith.constant 0.000000e+00 : f32
    %15 = vector.broadcast %cst_9 : f32 to vector<8x128xf32>
    %16 = arith.maximumf %14, %15 : vector<8x128xf32>
    %17 = arith.truncf %16 : vector<8x128xf32> to vector<8x128xbf16>
    %c144 = arith.constant 144 : index
    %c0_10 = arith.constant 0 : index
    %18 = vector.load %arg2[%c144, %c0_10] : memref<528x128xbf16, #tpu.memory_space<vmem>>, vector<128x128xbf16>
    %c16_11 = arith.constant 16 : index
    %c0_12 = arith.constant 0 : index
    %19 = vector.load %arg3[%c16_11, %c0_12] : memref<40x128xf32, #tpu.memory_space<vmem>>, vector<1x128xf32>
    %cst_13 = arith.constant dense<0.000000e+00> : vector<8x128xf32>
    %20 = tpu.matmul %17, %18, %cst_13 {dimension_numbers = #tpu.dot_dimension_numbers<[1], [0], [0], [1], [0, 0, 1, 1], [], []>} : vector<8x128xbf16>, vector<128x128xbf16>, vector<8x128xf32> -> vector<8x128xf32>
    %21 = vector.broadcast %19 : vector<1x128xf32> to vector<8x128xf32>
    %22 = arith.addf %20, %21 : vector<8x128xf32>
    %cst_14 = arith.constant 0.000000e+00 : f32
    %23 = vector.broadcast %cst_14 : f32 to vector<8x128xf32>
    %24 = arith.maximumf %22, %23 : vector<8x128xf32>
    %25 = arith.truncf %24 : vector<8x128xf32> to vector<8x128xbf16>
    %c272 = arith.constant 272 : index
    %c0_15 = arith.constant 0 : index
    %26 = vector.load %arg2[%c272, %c0_15] : memref<528x128xbf16, #tpu.memory_space<vmem>>, vector<128x128xbf16>
    %c24 = arith.constant 24 : index
    %c0_16 = arith.constant 0 : index
    %27 = vector.load %arg3[%c24, %c0_16] : memref<40x128xf32, #tpu.memory_space<vmem>>, vector<1x128xf32>
    %cst_17 = arith.constant dense<0.000000e+00> : vector<8x128xf32>
    %28 = tpu.matmul %25, %26, %cst_17 {dimension_numbers = #tpu.dot_dimension_numbers<[1], [0], [0], [1], [0, 0, 1, 1], [], []>} : vector<8x128xbf16>, vector<128x128xbf16>, vector<8x128xf32> -> vector<8x128xf32>
    %29 = vector.broadcast %27 : vector<1x128xf32> to vector<8x128xf32>
    %30 = arith.addf %28, %29 : vector<8x128xf32>
    %cst_18 = arith.constant 0.000000e+00 : f32
    %31 = vector.broadcast %cst_18 : f32 to vector<8x128xf32>
    %32 = arith.maximumf %30, %31 : vector<8x128xf32>
    %33 = arith.truncf %32 : vector<8x128xf32> to vector<8x128xbf16>
    %c400 = arith.constant 400 : index
    %c0_19 = arith.constant 0 : index
    %34 = vector.load %arg2[%c400, %c0_19] : memref<528x128xbf16, #tpu.memory_space<vmem>>, vector<128x128xbf16>
    %c32 = arith.constant 32 : index
    %c0_20 = arith.constant 0 : index
    %35 = vector.load %arg3[%c32, %c0_20] : memref<40x128xf32, #tpu.memory_space<vmem>>, vector<1x128xf32>
    %cst_21 = arith.constant dense<0.000000e+00> : vector<8x128xf32>
    %36 = tpu.matmul %33, %34, %cst_21 {dimension_numbers = #tpu.dot_dimension_numbers<[1], [0], [0], [1], [0, 0, 1, 1], [], []>} : vector<8x128xbf16>, vector<128x128xbf16>, vector<8x128xf32> -> vector<8x128xf32>
    %37 = vector.broadcast %35 : vector<1x128xf32> to vector<8x128xf32>
    %38 = arith.addf %36, %37 : vector<8x128xf32>
    %c0_22 = arith.constant 0 : index
    %c0_23 = arith.constant 0 : index
    %39 = vector.load %arg4[%c0_22, %c0_23] : memref<8x128xf32, #tpu.memory_space<vmem>>, vector<8x128xf32>
    tpu.vector_store %arg4[%c0_22, %c0_23], %38 {strides = array<i32>} : memref<8x128xf32, #tpu.memory_space<vmem>>, vector<8x128xf32>,
    return
  }
  func.func @transform_0(%arg0: i32) -> (i32, i32) {
    %c0_i32 = arith.constant 0 : i32
    %c0_i32_0 = arith.constant 0 : i32
    return %arg0, %c0_i32 : i32, i32
  }
  func.func @transform_1(%arg0: i32) -> (i32, i32) {
    %c0_i32 = arith.constant 0 : i32
    %c0_i32_0 = arith.constant 0 : i32
    %c0_i32_1 = arith.constant 0 : i32
    return %c0_i32, %c0_i32_0 : i32, i32
  }
  func.func @transform_2(%arg0: i32) -> (i32, i32) {
    %c0_i32 = arith.constant 0 : i32
    %c0_i32_0 = arith.constant 0 : i32
    %c0_i32_1 = arith.constant 0 : i32
    return %c0_i32, %c0_i32_0 : i32, i32
  }
  func.func @transform_3(%arg0: i32) -> (i32, i32) {
    %c0_i32 = arith.constant 0 : i32
    %c0_i32_0 = arith.constant 0 : i32
    return %arg0, %c0_i32 : i32, i32
  }
}

</mosaic_0001>

<llo_original>
// kernel: tpu_custom_call.1
$region0: #{tpu_custom_call.1}
  #allocation0 [shape = 'u32[]', space=smem, size = 0x4, offset = 0x4, fixed_abs, tag = 'smem constant byte address 0x4 - core index']
  #allocation1 [shape = 'u32[144,128]{1,0:T(1,128)}', space=vmem, size = 0x12000, scoped, tag = 'internal scratch']
  %s0 = inlined_call_operand.hbm [shape: f32[8,16], index: 0, kind: input, shape index: {}]
  %s1 = inlined_call_operand.hbm [shape: bf16[528,128], index: 1, kind: input, shape index: {}]
  %s2 = inlined_call_operand.hbm [shape: f32[40,128], index: 2, kind: input, shape index: {}]
  %s3 = inlined_call_operand.hbm [shape: f32[8,128], index: 3, kind: output, shape index: {}]
  %s4 = sld [smem:[#allocation0]]
  $region34: #{tpu_custom_call.1} parent=0
    _
  %s6 = ssub.s32 1, %s4
  %s7 = scalar_select 0, %s6, %s4
  $region1: #{tpu_custom_call.1} parent=0
    #allocation2 [shape = 'u8[4096]{0}', space=vmem, size = 0x1000, scoped, tag = 'input window, operand 0, single buffered']
    #allocation3 [shape = 's32[1]{0}', space=sflag, size = 0x4, scoped, tag = 'scoped memory for tpu_custom_call.1']
    #allocation4 [shape = 's32[1]{0}', space=sflag, size = 0x4, scoped, tag = 'scoped memory for tpu_custom_call.1']
    #allocation5 [shape = 'u8[135168]{0}', space=vmem, size = 0x21000, scoped, tag = 'input window, operand 1, single buffered']
    #allocation6 [shape = 's32[1]{0}', space=sflag, size = 0x4, scoped, tag = 'scoped memory for tpu_custom_call.1']
    #allocation7 [shape = 'u8[20480]{0}', space=vmem, size = 0x5000, scoped, tag = 'input window, operand 2, single buffered']
    #allocation8 [shape = 'u8[4096]{0}', space=vmem, size = 0x1000, scoped, tag = 'output window, operand 0, single buffered']
    %8 = vsyncpa [#allocation3], 0
    %9 = vsyncpa [#allocation6], 0
    %10 = vsyncpa [#allocation4], 0
    // Predicated region
    $region2: #{tpu_custom_call.1} parent=1 // pred_check
      _
    $region3: #{tpu_custom_call.1} parent=1 // pred_check_branch
      %12 = sbr.rel (0) target = $region5
    $region4: #{tpu_custom_call.1} parent=1 // pred_region
      %s14 = ssub.s32 128, 128
      %15 = vsyncadd [#allocation3], %s14
      %s17 = sshll.u32 [#allocation2], 4
      %s18 = int_to_ptr.vmem [resolvable:$true] %s17
      %20 = dma.hbm_to_vmem [thread:$0]  %s0, 128, %s18, [#allocation3]
    $region5: #{tpu_custom_call.1} parent=1 // pred_fallthru
      _
    // Predicated region
    $region6: #{tpu_custom_call.1} parent=1 // pred_check
      _
    $region7: #{tpu_custom_call.1} parent=1 // pred_check_branch
      %22 = sbr.rel (0) target = $region9
    $region8: #{tpu_custom_call.1} parent=1 // pred_region
      %s24 = ssub.s32 4224, 4224
      %25 = vsyncadd [#allocation6], %s24
      %s26 = sshll.u32 [#allocation5], 4
      %s27 = int_to_ptr.vmem [resolvable:$true] %s26
      %32 = dma.hbm_to_vmem [thread:$0]  %s1, 4224, %s27, [#allocation6], 64, 64, 4
    $region9: #{tpu_custom_call.1} parent=1 // pred_fallthru
      _
    // Predicated region
    $region10: #{tpu_custom_call.1} parent=1 // pred_check
      _
    $region11: #{tpu_custom_call.1} parent=1 // pred_check_branch
      %34 = sbr.rel (0) target = $region13
    $region12: #{tpu_custom_call.1} parent=1 // pred_region
      %s36 = ssub.s32 640, 640
      %37 = vsyncadd [#allocation6], %s36
      %s38 = sshll.u32 [#allocation7], 4
      %s39 = int_to_ptr.vmem [resolvable:$true] %s38
      %44 = dma.hbm_to_vmem [thread:$0]  %s2, 640, %s39, [#allocation6], 128, 128, 8
    $region13: #{tpu_custom_call.1} parent=1 // pred_fallthru
      _
    // Predicated region
    $region14: #{tpu_custom_call.1} parent=1 // pred_check
      _
    $region15: #{tpu_custom_call.1} parent=1 // pred_check_branch
      %46 = sbr.rel (0) target = $region17
    $region16: #{tpu_custom_call.1} parent=1 // pred_region
      %47 = dma.done [#allocation3], 128
    $region17: #{tpu_custom_call.1} parent=1 // pred_fallthru
      _
    // Predicated region
    $region18: #{tpu_custom_call.1} parent=1 // pred_check
      _
    $region19: #{tpu_custom_call.1} parent=1 // pred_check_branch
      %49 = sbr.rel (0) target = $region21
    $region20: #{tpu_custom_call.1} parent=1 // pred_region
      %50 = dma.done [#allocation6], 4224
    $region21: #{tpu_custom_call.1} parent=1 // pred_fallthru
      _
    // Predicated region
    $region22: #{tpu_custom_call.1} parent=1 // pred_check
      _
    $region23: #{tpu_custom_call.1} parent=1 // pred_check_branch
      %52 = sbr.rel (0) target = $region25
    $region24: #{tpu_custom_call.1} parent=1 // pred_region
      %53 = dma.done [#allocation6], 640
    $region25: #{tpu_custom_call.1} parent=1 // pred_fallthru
      _
    %v55 = vld [vmem:[#allocation2] sm:$0xff]
    %v56 = vpack.c.bf16 %v55, %v55
    %v57 = vld [vmem:[#allocation5] sm:$0xf]
    %v58 = vld [vmem:[#allocation5 + $0x4] sm:$0xf]
    %v59 = vld [vmem:[#allocation7] sm:$0x1]
    %v60 = vlaneseq
    %v61 = vshrl.u32 %v60, 7
    %v62 = vsub.s32 0, %v61
    %v63 = vrot.slane %v59, %v62
    %v66 = vunpack.c.l.b16 %v57
    %v67 = vunpack.c.l.b16 %v58
    %v68 = vpack.c.b16 %v67, %v66
    %vm70 = vcmask 130048
    %v72 = vsel %vm70, %v56, 0
    %74 = vmatprep.subr.bf16.mxu0 0
    %75 = vmatpush1.bf16.msra.mxu0 %v68
    %76 = vmatprep.subr.bf16.mxu0 0
    %77 = vmatpush1.bf16.msra.mxu0 0
    %78 = vmatprep.subr.bf16.mxu0 0
    %79 = vmatpush1.bf16.msra.mxu0 0
    %80 = vmatprep.subr.bf16.mxu0 0
    %81 = vmatpush1.bf16.msra.mxu0 0
    %82 = vmatprep.subr.bf16.mxu0 0
    %83 = vmatpush1.bf16.msra.mxu0 0
    %84 = vmatprep.subr.bf16.mxu0 0
    %85 = vmatpush1.bf16.msra.mxu0 0
    %86 = vmatprep.subr.bf16.mxu0 0
    %87 = vmatpush1.bf16.msra.mxu0 0
    %88 = vmatprep.subr.bf16.mxu0 0
    %89 = vmatpush1.bf16.msra.mxu0 0
    %90 = vmatprep.subr.bf16.mxu0 0
    %91 = vmatpush1.bf16.msra.mxu0 0
    %92 = vmatprep.subr.bf16.mxu0 0
    %93 = vmatpush1.bf16.msra.mxu0 0
    %94 = vmatprep.subr.bf16.mxu0 0
    %95 = vmatpush1.bf16.msra.mxu0 0
    %96 = vmatprep.subr.bf16.mxu0 0
    %97 = vmatpush1.bf16.msra.mxu0 0
    %98 = vmatprep.subr.bf16.mxu0 0
    %99 = vmatpush1.bf16.msra.mxu0 0
    %100 = vmatprep.subr.bf16.mxu0 0
    %101 = vmatpush1.bf16.msra.mxu0 0
    %102 = vmatprep.subr.bf16.mxu0 0
    %103 = vmatpush1.bf16.msra.mxu0 0
    %104 = vmatprep.subr.bf16.mxu0 0
    %105 = vmatpush1.bf16.msra.mxu0 0
    %106 = vmatprep.mubr.bf16.mxu0 0
    %107 = vmatmul.mubr.bf16.gmra.mrb[0].mxu0 %v72
    %v108 = vpop.f32.mrb[0].mxu0
    %v109 = vadd.f32 %v63, %v108
    %v110 = vpop.f32.mrb[0].mxu0
    %v111 = vpop.f32.mrb[0].mxu0
    %v112 = vpop.f32.mrb[0].mxu0
    %113 = vdwg.mxu0
    %v114 = vmax.f32 %v109, 0.0
    %v115 = vpack.c.bf16 %v114, %v114
    %v116 = vld [vmem:[#allocation5 + $0x8] sm:$0xf]
    %v117 = vld [vmem:[#allocation5 + $0xc] sm:$0xf]
    %v118 = vld [vmem:[#allocation5 + $0x10] sm:$0xf]
    %v119 = vld [vmem:[#allocation5 + $0x14] sm:$0xf]
    %v120 = vld [vmem:[#allocation5 + $0x18] sm:$0xf]
    %v121 = vld [vmem:[#allocation5 + $0x1c] sm:$0xf]
    %v122 = vld [vmem:[#allocation5 + $0x20] sm:$0xf]
    %v123 = vld [vmem:[#allocation5 + $0x24] sm:$0xf]
    %v124 = vld [vmem:[#allocation5 + $0x28] sm:$0xf]
    %v125 = vld [vmem:[#allocation5 + $0x2c] sm:$0xf]
    %v126 = vld [vmem:[#allocation5 + $0x30] sm:$0xf]
    %v127 = vld [vmem:[#allocation5 + $0x34] sm:$0xf]
    %v128 = vld [vmem:[#allocation5 + $0x38] sm:$0xf]
    %v129 = vld [vmem:[#allocation5 + $0x3c] sm:$0xf]
    %v130 = vld [vmem:[#allocation5 + $0x40] sm:$0xf]
    %v131 = vld [vmem:[#allocation5 + $0x44] sm:$0xf]
    %v132 = vld [vmem:[#allocation7 + $0x8] sm:$0x1]
    %v133 = vlaneseq
    %v134 = vshrl.u32 %v133, 7
    %v135 = vsub.s32 0, %v134
    %v136 = vrot.slane %v132, %v135
    %v153 = vunpack.c.l.b16 %v116
    %v154 = vunpack.c.l.b16 %v117
    %v155 = vunpack.c.l.b16 %v118
    %v156 = vunpack.c.l.b16 %v119
    %v157 = vunpack.c.l.b16 %v120
    %v158 = vunpack.c.l.b16 %v121
    %v159 = vunpack.c.l.b16 %v122
    %v160 = vunpack.c.l.b16 %v123
    %v161 = vunpack.c.l.b16 %v124
    %v162 = vunpack.c.l.b16 %v125
    %v163 = vunpack.c.l.b16 %v126
    %v164 = vunpack.c.l.b16 %v127
    %v165 = vunpack.c.l.b16 %v128
    %v166 = vunpack.c.l.b16 %v129
    %v167 = vunpack.c.l.b16 %v130
    %v168 = vunpack.c.l.b16 %v131
    %v169 = vpack.c.b16 %v154, %v153
    %v170 = vpack.c.b16 %v156, %v155
    %v171 = vpack.c.b16 %v158, %v157
    %v172 = vpack.c.b16 %v160, %v159
    %v173 = vpack.c.b16 %v162, %v161
    %v174 = vpack.c.b16 %v164, %v163
    %v175 = vpack.c.b16 %v166, %v165
    %v176 = vpack.c.b16 %v168, %v167
    %185 = vmatprep.subr.bf16.mxu0 0
    %186 = vmatpush1.bf16.msra.mxu0 %v169
    %187 = vmatprep.subr.bf16.mxu0 0
    %188 = vmatpush1.bf16.msra.mxu0 %v170
    %189 = vmatprep.subr.bf16.mxu0 0
    %190 = vmatpush1.bf16.msra.mxu0 %v171
    %191 = vmatprep.subr.bf16.mxu0 0
    %192 = vmatpush1.bf16.msra.mxu0 %v172
    %193 = vmatprep.subr.bf16.mxu0 0
    %194 = vmatpush1.bf16.msra.mxu0 %v173
    %195 = vmatprep.subr.bf16.mxu0 0
    %196 = vmatpush1.bf16.msra.mxu0 %v174
    %197 = vmatprep.subr.bf16.mxu0 0
    %198 = vmatpush1.bf16.msra.mxu0 %v175
    %199 = vmatprep.subr.bf16.mxu0 0
    %200 = vmatpush1.bf16.msra.mxu0 %v176
    %201 = vmatprep.subr.bf16.mxu0 0
    %202 = vmatpush1.bf16.msra.mxu0 0
    %203 = vmatprep.subr.bf16.mxu0 0
    %204 = vmatpush1.bf16.msra.mxu0 0
    %205 = vmatprep.subr.bf16.mxu0 0
    %206 = vmatpush1.bf16.msra.mxu0 0
    %207 = vmatprep.subr.bf16.mxu0 0
    %208 = vmatpush1.bf16.msra.mxu0 0
    %209 = vmatprep.subr.bf16.mxu0 0
    %210 = vmatpush1.bf16.msra.mxu0 0
    %211 = vmatprep.subr.bf16.mxu0 0
    %212 = vmatpush1.bf16.msra.mxu0 0
    %213 = vmatprep.subr.bf16.mxu0 0
    %214 = vmatpush1.bf16.msra.mxu0 0
    %215 = vmatprep.subr.bf16.mxu0 0
    %216 = vmatpush1.bf16.msra.mxu0 0
    %217 = vmatprep.mubr.bf16.mxu0 0
    %218 = vmatmul.mubr.bf16.gmra.mrb[0].mxu0 %v115
    %v219 = vpop.f32.mrb[0].mxu0
    %v220 = vadd.f32 %v136, %v219
    %v221 = vpop.f32.mrb[0].mxu0
    %v222 = vpop.f32.mrb[0].mxu0
    %v223 = vpop.f32.mrb[0].mxu0
    %224 = vdwg.mxu0
    %v225 = vmax.f32 %v220, 0.0
    %v226 = vpack.c.bf16 %v225, %v225
    %v227 = vld [vmem:[#allocation5 + $0x48] sm:$0xf]
    %v228 = vld [vmem:[#allocation5 + $0x4c] sm:$0xf]
    %v229 = vld [vmem:[#allocation5 + $0x50] sm:$0xf]
    %v230 = vld [vmem:[#allocation5 + $0x54] sm:$0xf]
    %v231 = vld [vmem:[#allocation5 + $0x58] sm:$0xf]
    %v232 = vld [vmem:[#allocation5 + $0x5c] sm:$0xf]
    %v233 = vld [vmem:[#allocation5 + $0x60] sm:$0xf]
    %v234 = vld [vmem:[#allocation5 + $0x64] sm:$0xf]
    %v235 = vld [vmem:[#allocation5 + $0x68] sm:$0xf]
    %v236 = vld [vmem:[#allocation5 + $0x6c] sm:$0xf]
    %v237 = vld [vmem:[#allocation5 + $0x70] sm:$0xf]
    %v238 = vld [vmem:[#allocation5 + $0x74] sm:$0xf]
    %v239 = vld [vmem:[#allocation5 + $0x78] sm:$0xf]
    %v240 = vld [vmem:[#allocation5 + $0x7c] sm:$0xf]
    %v241 = vld [vmem:[#allocation5 + $0x80] sm:$0xf]
    %v242 = vld [vmem:[#allocation5 + $0x84] sm:$0xf]
    %v243 = vld [vmem:[#allocation7 + $0x10] sm:$0x1]
    %v244 = vlaneseq
    %v245 = vshrl.u32 %v244, 7
    %v246 = vsub.s32 0, %v245
    %v247 = vrot.slane %v243, %v246
    %v264 = vunpack.c.l.b16 %v227
    %v265 = vunpack.c.l.b16 %v228
    %v266 = vunpack.c.l.b16 %v229
    %v267 = vunpack.c.l.b16 %v230
    %v268 = vunpack.c.l.b16 %v231
    %v269 = vunpack.c.l.b16 %v232
    %v270 = vunpack.c.l.b16 %v233
    %v271 = vunpack.c.l.b16 %v234
    %v272 = vunpack.c.l.b16 %v235
    %v273 = vunpack.c.l.b16 %v236
    %v274 = vunpack.c.l.b16 %v237
    %v275 = vunpack.c.l.b16 %v238
    %v276 = vunpack.c.l.b16 %v239
    %v277 = vunpack.c.l.b16 %v240
    %v278 = vunpack.c.l.b16 %v241
    %v279 = vunpack.c.l.b16 %v242
    %v280 = vpack.c.b16 %v265, %v264
    %v281 = vpack.c.b16 %v267, %v266
    %v282 = vpack.c.b16 %v269, %v268
    %v283 = vpack.c.b16 %v271, %v270
    %v284 = vpack.c.b16 %v273, %v272
    %v285 = vpack.c.b16 %v275, %v274
    %v286 = vpack.c.b16 %v277, %v276
    %v287 = vpack.c.b16 %v279, %v278
    %296 = vmatprep.subr.bf16.mxu0 0
    %297 = vmatpush1.bf16.msra.mxu0 %v280
    %298 = vmatprep.subr.bf16.mxu0 0
    %299 = vmatpush1.bf16.msra.mxu0 %v281
    %300 = vmatprep.subr.bf16.mxu0 0
    %301 = vmatpush1.bf16.msra.mxu0 %v282
    %302 = vmatprep.subr.bf16.mxu0 0
    %303 = vmatpush1.bf16.msra.mxu0 %v283
    %304 = vmatprep.subr.bf16.mxu0 0
    %305 = vmatpush1.bf16.msra.mxu0 %v284
    %306 = vmatprep.subr.bf16.mxu0 0
    %307 = vmatpush1.bf16.msra.mxu0 %v285
    %308 = vmatprep.subr.bf16.mxu0 0
    %309 = vmatpush1.bf16.msra.mxu0 %v286
    %310 = vmatprep.subr.bf16.mxu0 0
    %311 = vmatpush1.bf16.msra.mxu0 %v287
    %312 = vmatprep.subr.bf16.mxu0 0
    %313 = vmatpush1.bf16.msra.mxu0 0
    %314 = vmatprep.subr.bf16.mxu0 0
    %315 = vmatpush1.bf16.msra.mxu0 0
    %316 = vmatprep.subr.bf16.mxu0 0
    %317 = vmatpush1.bf16.msra.mxu0 0
    %318 = vmatprep.subr.bf16.mxu0 0
    %319 = vmatpush1.bf16.msra.mxu0 0
    %320 = vmatprep.subr.bf16.mxu0 0
    %321 = vmatpush1.bf16.msra.mxu0 0
    %322 = vmatprep.subr.bf16.mxu0 0
    %323 = vmatpush1.bf16.msra.mxu0 0
    %324 = vmatprep.subr.bf16.mxu0 0
    %325 = vmatpush1.bf16.msra.mxu0 0
    %326 = vmatprep.subr.bf16.mxu0 0
    %327 = vmatpush1.bf16.msra.mxu0 0
    %328 = vmatprep.mubr.bf16.mxu0 0
    %329 = vmatmul.mubr.bf16.gmra.mrb[0].mxu0 %v226
    %v330 = vpop.f32.mrb[0].mxu0
    %v331 = vadd.f32 %v247, %v330
    %v332 = vpop.f32.mrb[0].mxu0
    %v333 = vpop.f32.mrb[0].mxu0
    %v334 = vpop.f32.mrb[0].mxu0
    %335 = vdwg.mxu0
    %v336 = vmax.f32 %v331, 0.0
    %v337 = vpack.c.bf16 %v336, %v336
    %v338 = vld [vmem:[#allocation5 + $0x88] sm:$0xf]
    %v339 = vld [vmem:[#allocation5 + $0x8c] sm:$0xf]
    %v340 = vld [vmem:[#allocation5 + $0x90] sm:$0xf]
    %v341 = vld [vmem:[#allocation5 + $0x94] sm:$0xf]
    %v342 = vld [vmem:[#allocation5 + $0x98] sm:$0xf]
    %v343 = vld [vmem:[#allocation5 + $0x9c] sm:$0xf]
    %v344 = vld [vmem:[#allocation5 + $0xa0] sm:$0xf]
    %v345 = vld [vmem:[#allocation5 + $0xa4] sm:$0xf]
    %v346 = vld [vmem:[#allocation5 + $0xa8] sm:$0xf]
    %v347 = vld [vmem:[#allocation5 + $0xac] sm:$0xf]
    %v348 = vld [vmem:[#allocation5 + $0xb0] sm:$0xf]
    %v349 = vld [vmem:[#allocation5 + $0xb4] sm:$0xf]
    %v350 = vld [vmem:[#allocation5 + $0xb8] sm:$0xf]
    %v351 = vld [vmem:[#allocation5 + $0xbc] sm:$0xf]
    %v352 = vld [vmem:[#allocation5 + $0xc0] sm:$0xf]
    %v353 = vld [vmem:[#allocation5 + $0xc4] sm:$0xf]
    %v354 = vld [vmem:[#allocation7 + $0x18] sm:$0x1]
    %v355 = vlaneseq
    %v356 = vshrl.u32 %v355, 7
    %v357 = vsub.s32 0, %v356
    %v358 = vrot.slane %v354, %v357
    %v375 = vunpack.c.l.b16 %v338
    %v376 = vunpack.c.l.b16 %v339
    %v377 = vunpack.c.l.b16 %v340
    %v378 = vunpack.c.l.b16 %v341
    %v379 = vunpack.c.l.b16 %v342
    %v380 = vunpack.c.l.b16 %v343
    %v381 = vunpack.c.l.b16 %v344
    %v382 = vunpack.c.l.b16 %v345
    %v383 = vunpack.c.l.b16 %v346
    %v384 = vunpack.c.l.b16 %v347
    %v385 = vunpack.c.l.b16 %v348
    %v386 = vunpack.c.l.b16 %v349
    %v387 = vunpack.c.l.b16 %v350
    %v388 = vunpack.c.l.b16 %v351
    %v389 = vunpack.c.l.b16 %v352
    %v390 = vunpack.c.l.b16 %v353
    %v391 = vpack.c.b16 %v376, %v375
    %v392 = vpack.c.b16 %v378, %v377
    %v393 = vpack.c.b16 %v380, %v379
    %v394 = vpack.c.b16 %v382, %v381
    %v395 = vpack.c.b16 %v384, %v383
    %v396 = vpack.c.b16 %v386, %v385
    %v397 = vpack.c.b16 %v388, %v387
    %v398 = vpack.c.b16 %v390, %v389
    %407 = vmatprep.subr.bf16.mxu0 0
    %408 = vmatpush1.bf16.msra.mxu0 %v391
    %409 = vmatprep.subr.bf16.mxu0 0
    %410 = vmatpush1.bf16.msra.mxu0 %v392
    %411 = vmatprep.subr.bf16.mxu0 0
    %412 = vmatpush1.bf16.msra.mxu0 %v393
    %413 = vmatprep.subr.bf16.mxu0 0
    %414 = vmatpush1.bf16.msra.mxu0 %v394
    %415 = vmatprep.subr.bf16.mxu0 0
    %416 = vmatpush1.bf16.msra.mxu0 %v395
    %417 = vmatprep.subr.bf16.mxu0 0
    %418 = vmatpush1.bf16.msra.mxu0 %v396
    %419 = vmatprep.subr.bf16.mxu0 0
    %420 = vmatpush1.bf16.msra.mxu0 %v397
    %421 = vmatprep.subr.bf16.mxu0 0
    %422 = vmatpush1.bf16.msra.mxu0 %v398
    %423 = vmatprep.subr.bf16.mxu0 0
    %424 = vmatpush1.bf16.msra.mxu0 0
    %425 = vmatprep.subr.bf16.mxu0 0
    %426 = vmatpush1.bf16.msra.mxu0 0
    %427 = vmatprep.subr.bf16.mxu0 0
    %428 = vmatpush1.bf16.msra.mxu0 0
    %429 = vmatprep.subr.bf16.mxu0 0
    %430 = vmatpush1.bf16.msra.mxu0 0
    %431 = vmatprep.subr.bf16.mxu0 0
    %432 = vmatpush1.bf16.msra.mxu0 0
    %433 = vmatprep.subr.bf16.mxu0 0
    %434 = vmatpush1.bf16.msra.mxu0 0
    %435 = vmatprep.subr.bf16.mxu0 0
    %436 = vmatpush1.bf16.msra.mxu0 0
    %437 = vmatprep.subr.bf16.mxu0 0
    %438 = vmatpush1.bf16.msra.mxu0 0
    %439 = vmatprep.mubr.bf16.mxu0 0
    %440 = vmatmul.mubr.bf16.gmra.mrb[0].mxu0 %v337
    %v441 = vpop.f32.mrb[0].mxu0
    %v442 = vadd.f32 %v358, %v441
    %v443 = vpop.f32.mrb[0].mxu0
    %v444 = vpop.f32.mrb[0].mxu0
    %v445 = vpop.f32.mrb[0].mxu0
    %446 = vdwg.mxu0
    %v447 = vmax.f32 %v442, 0.0
    %v448 = vpack.c.bf16 %v447, %v447
    %v449 = vld [vmem:[#allocation5 + $0xc8] sm:$0xf]
    %v450 = vld [vmem:[#allocation5 + $0xcc] sm:$0xf]
    %v451 = vld [vmem:[#allocation5 + $0xd0] sm:$0xf]
    %v452 = vld [vmem:[#allocation5 + $0xd4] sm:$0xf]
    %v453 = vld [vmem:[#allocation5 + $0xd8] sm:$0xf]
    %v454 = vld [vmem:[#allocation5 + $0xdc] sm:$0xf]
    %v455 = vld [vmem:[#allocation5 + $0xe0] sm:$0xf]
    %v456 = vld [vmem:[#allocation5 + $0xe4] sm:$0xf]
    %v457 = vld [vmem:[#allocation5 + $0xe8] sm:$0xf]
    %v458 = vld [vmem:[#allocation5 + $0xec] sm:$0xf]
    %v459 = vld [vmem:[#allocation5 + $0xf0] sm:$0xf]
    %v460 = vld [vmem:[#allocation5 + $0xf4] sm:$0xf]
    %v461 = vld [vmem:[#allocation5 + $0xf8] sm:$0xf]
    %v462 = vld [vmem:[#allocation5 + $0xfc] sm:$0xf]
    %v463 = vld [vmem:[#allocation5 + $0x100] sm:$0xf]
    %v464 = vld [vmem:[#allocation5 + $0x104] sm:$0xf]
    %v465 = vld [vmem:[#allocation7 + $0x20] sm:$0x1]
    %v466 = vlaneseq
    %v467 = vshrl.u32 %v466, 7
    %v468 = vsub.s32 0, %v467
    %v469 = vrot.slane %v465, %v468
    %v486 = vunpack.c.l.b16 %v449
    %v487 = vunpack.c.l.b16 %v450
    %v488 = vunpack.c.l.b16 %v451
    %v489 = vunpack.c.l.b16 %v452
    %v490 = vunpack.c.l.b16 %v453
    %v491 = vunpack.c.l.b16 %v454
    %v492 = vunpack.c.l.b16 %v455
    %v493 = vunpack.c.l.b16 %v456
    %v494 = vunpack.c.l.b16 %v457
    %v495 = vunpack.c.l.b16 %v458
    %v496 = vunpack.c.l.b16 %v459
    %v497 = vunpack.c.l.b16 %v460
    %v498 = vunpack.c.l.b16 %v461
    %v499 = vunpack.c.l.b16 %v462
    %v500 = vunpack.c.l.b16 %v463
    %v501 = vunpack.c.l.b16 %v464
    %v502 = vpack.c.b16 %v487, %v486
    %v503 = vpack.c.b16 %v489, %v488
    %v504 = vpack.c.b16 %v491, %v490
    %v505 = vpack.c.b16 %v493, %v492
    %v506 = vpack.c.b16 %v495, %v494
    %v507 = vpack.c.b16 %v497, %v496
    %v508 = vpack.c.b16 %v499, %v498
    %v509 = vpack.c.b16 %v501, %v500
    %518 = vmatprep.subr.bf16.mxu0 0
    %519 = vmatpush1.bf16.msra.mxu0 %v502
    %520 = vmatprep.subr.bf16.mxu0 0
    %521 = vmatpush1.bf16.msra.mxu0 %v503
    %522 = vmatprep.subr.bf16.mxu0 0
    %523 = vmatpush1.bf16.msra.mxu0 %v504
    %524 = vmatprep.subr.bf16.mxu0 0
    %525 = vmatpush1.bf16.msra.mxu0 %v505
    %526 = vmatprep.subr.bf16.mxu0 0
    %527 = vmatpush1.bf16.msra.mxu0 %v506
    %528 = vmatprep.subr.bf16.mxu0 0
    %529 = vmatpush1.bf16.msra.mxu0 %v507
    %530 = vmatprep.subr.bf16.mxu0 0
    %531 = vmatpush1.bf16.msra.mxu0 %v508
    %532 = vmatprep.subr.bf16.mxu0 0
    %533 = vmatpush1.bf16.msra.mxu0 %v509
    %534 = vmatprep.subr.bf16.mxu0 0
    %535 = vmatpush1.bf16.msra.mxu0 0
    %536 = vmatprep.subr.bf16.mxu0 0
    %537 = vmatpush1.bf16.msra.mxu0 0
    %538 = vmatprep.subr.bf16.mxu0 0
    %539 = vmatpush1.bf16.msra.mxu0 0
    %540 = vmatprep.subr.bf16.mxu0 0
    %541 = vmatpush1.bf16.msra.mxu0 0
    %542 = vmatprep.subr.bf16.mxu0 0
    %543 = vmatpush1.bf16.msra.mxu0 0
    %544 = vmatprep.subr.bf16.mxu0 0
    %545 = vmatpush1.bf16.msra.mxu0 0
    %546 = vmatprep.subr.bf16.mxu0 0
    %547 = vmatpush1.bf16.msra.mxu0 0
    %548 = vmatprep.subr.bf16.mxu0 0
    %549 = vmatpush1.bf16.msra.mxu0 0
    %550 = vmatprep.mubr.bf16.mxu0 0
    %551 = vmatmul.mubr.bf16.gmra.mrb[0].mxu0 %v448
    %v552 = vpop.f32.mrb[0].mxu0
    %v553 = vadd.f32 %v469, %v552
    %v554 = vpop.f32.mrb[0].mxu0
    %v555 = vpop.f32.mrb[0].mxu0
    %v556 = vpop.f32.mrb[0].mxu0
    %557 = vdwg.mxu0
    %558 = vst [vmem:[#allocation8] sm:$0xff] %v553
    // Predicated region
    $region26: #{tpu_custom_call.1} parent=1 // pred_check
      _
    $region27: #{tpu_custom_call.1} parent=1 // pred_check_branch
      %560 = sbr.rel (0) target = $region29
    $region28: #{tpu_custom_call.1} parent=1 // pred_region
      %s562 = ssub.s32 128, 128
      %563 = vsyncadd [#allocation4], %s562
      %s565 = sshll.u32 [#allocation8], 4
      %s566 = int_to_ptr.vmem [resolvable:$true] %s565
      %568 = dma.vmem_to_hbm [thread:$0]  %s566, 128, %s3, [#allocation4]
    $region29: #{tpu_custom_call.1} parent=1 // pred_fallthru
      _
    // Predicated region
    $region30: #{tpu_custom_call.1} parent=1 // pred_check
      _
    $region31: #{tpu_custom_call.1} parent=1 // pred_check_branch
      %570 = sbr.rel (0) target = $region33
    $region32: #{tpu_custom_call.1} parent=1 // pred_region
      %571 = dma.done [#allocation4], 128
    $region33: #{tpu_custom_call.1} parent=1 // pred_fallthru
      _
    %572 = vsyncpa [#allocation3], 1
    %573 = vsyncpa [#allocation6], 1
    %574 = vsyncpa [#allocation4], 1

</llo_original>
